<compile_context>
chip_gen: v7x
topology: tpu7x:2x2x1
jax: 0.10.0
libtpu: 0.0.40
codegen_flags: <defaults>
</compile_context>

<pallas_src>
import jax
import jax.numpy as jnp
import numpy as np
from jax.experimental import pallas as pl
from jax.experimental.pallas import tpu as pltpu


def _fbank_aug_kernel(tg_ref, fg_ref, x_ref, o_ref):
    """tg_ref: (BB, 1, T) int32 time-band indicator (1 = masked).
    fg_ref: (BB, F, 1) int32 freq-band indicator (1 = masked).
    x_ref / o_ref: (BB, F, T) block of the input / output."""
    tmask = tg_ref[...] > 0            # (BB, 1, T) — small-shape compare
    fmask = fg_ref[...] > 0            # (BB, F, 1) — small-shape compare
    # Only the OR + select touch the full (BB, F, T) block.
    o_ref[...] = jnp.where(tmask | fmask, 0, x_ref[...]).astype(o_ref.dtype)


def _pick_batch_block(B, per_batch_bytes, target_bytes=2 * 1024 * 1024):
    """Largest divisor of B whose block stays <= ~2 MiB; keep grid >= 2 when
    B >= 2 so 'parallel' can use both TensorCores on v7x."""
    cap = max(1, target_bytes // max(1, per_batch_bytes))
    if B >= 2:
        cap = max(1, min(cap, B // 2))
    bb = 1
    for d in range(1, B + 1):
        if B % d == 0 and d <= cap:
            bb = d
    return bb


def fbank_aug(x, key, freq_mask_width=(0, 8), time_mask_width=(0, 10)):
    """JAX/Pallas equivalent of FbankAug.forward. Returns (out, mask_params)."""
    B, F0, T0 = x.shape
    k1, k2, k3, k4 = jax.random.split(key, 4)
    # time mask (dim=2) — same distribution as torch.randint in the module
    t_len = jax.random.randint(k1, (B,), time_mask_width[0], time_mask_width[1])
    t_pos = jax.random.randint(k2, (B,), 0, jnp.maximum(1, T0 - jnp.max(t_len)))
    # freq mask (dim=1)
    f_len = jax.random.randint(k3, (B,), freq_mask_width[0], freq_mask_width[1])
    f_pos = jax.random.randint(k4, (B,), 0, jnp.maximum(1, F0 - jnp.max(f_len)))
    mask_params = jnp.stack([t_pos, t_len, f_pos, f_len], axis=1).astype(jnp.int32)

    # Tiny host-side gate vectors (B*(F+T) ints of HBM traffic — negligible).
    t_ar = jnp.arange(T0, dtype=jnp.int32)[None, :]
    f_ar = jnp.arange(F0, dtype=jnp.int32)[None, :]
    t_gate = ((t_ar >= t_pos[:, None]) & (t_ar < (t_pos + t_len)[:, None])).astype(jnp.int32)
    f_gate = ((f_ar >= f_pos[:, None]) & (f_ar < (f_pos + f_len)[:, None])).astype(jnp.int32)

    # Lane-dense padding: T -> multiple of 128 (lanes), F -> multiple of 8 (f32 sublanes).
    T = ((T0 + 127) // 128) * 128
    F_ = ((F0 + 7) // 8) * 8
    xp = x
    if (T != T0) or (F_ != F0):
        xp = jnp.pad(x, ((0, 0), (0, F_ - F0), (0, T - T0)))
    tg = t_gate if T == T0 else jnp.pad(t_gate, ((0, 0), (0, T - T0)))
    fg = f_gate if F_ == F0 else jnp.pad(f_gate, ((0, 0), (0, F_ - F0)))
    tg = tg[:, None, :]                 # (B, 1, T)
    fg = fg[:, :, None]                 # (B, F_, 1)

    per_batch_bytes = F_ * T * xp.dtype.itemsize
    bb = _pick_batch_block(B, per_batch_bytes)
    grid = (B // bb,)

    out_p = pl.pallas_call(
        _fbank_aug_kernel,
        out_shape=jax.ShapeDtypeStruct((B, F_, T), xp.dtype),
        grid=grid,
        in_specs=[
            pl.BlockSpec((bb, 1, T), lambda i: (i, 0, 0)),
            pl.BlockSpec((bb, F_, 1), lambda i: (i, 0, 0)),
            pl.BlockSpec((bb, F_, T), lambda i: (i, 0, 0)),
        ],
        out_specs=pl.BlockSpec((bb, F_, T), lambda i: (i, 0, 0)),
        compiler_params=pltpu.CompilerParams(
            dimension_semantics=("parallel",),   # batch groups independent
        ),
    )(tg, fg, xp)

    out = out_p if (T == T0 and F_ == F0) else out_p[:, :F0, :T0]
    return out, mask_params


def reference(x, mask_params):
    """Pure-JAX reference using the same mask parameters, for validation."""
    B, F0, T0 = x.shape
    t_pos = mask_params[:, 0][:, None]
    t_len = mask_params[:, 1][:, None]
    f_pos = mask_params[:, 2][:, None]
    f_len = mask_params[:, 3][:, None]
    t_ar = jnp.arange(T0)[None, :]
    f_ar = jnp.arange(F0)[None, :]
    tmask = (t_ar >= t_pos) & (t_ar < t_pos + t_len)          # (B, T)
    fmask = (f_ar >= f_pos) & (f_ar < f_pos + f_len)          # (B, F)
    x = jnp.where(tmask[:, None, :], 0.0, x)                  # mask_along_axis dim=2
    x = jnp.where(fmask[:, :, None], 0.0, x)                  # mask_along_axis dim=1
    return x


if __name__ == "__main__":
    key = jax.random.PRNGKey(0)
    # (batch, mel bins, frames): one aligned shape, one that exercises padding.
    for (B, F0, T0) in [(2, 16, 128), (4, 16, 100)]:
        key, kx, km = jax.random.split(key, 3)
        x = jax.random.normal(kx, (B, F0, T0), jnp.float32)

        out, mask_params = fbank_aug(x, km)
        out = jax.block_until_ready(out)

        ref = reference(x, mask_params)
        assert out.shape == (B, F0, T0)
        np.testing.assert_allclose(np.asarray(out), np.asarray(ref), atol=0.0, rtol=0.0)
    print("KERNEL_OK")
</pallas_src>

<mosaic_0001>
module attributes {stable_mosaic.version = 11 : i64} {
  func.func @_fbank_aug_kernel(%arg0: i32, %arg1: memref<1x1x128xi32, #tpu.memory_space<vmem>>, %arg2: memref<1x16x1xi32, #tpu.memory_space<vmem>>, %arg3: memref<1x16x128xf32, #tpu.memory_space<vmem>>, %arg4: memref<1x16x128xf32, #tpu.memory_space<vmem>>) attributes {dimension_semantics = [#tpu.dimension_semantics<parallel>], iteration_bounds = array<i64: 2>, scalar_prefetch = 0 : i64, scratch_operands = 0 : i64, tpu.core_type = #tpu.core_type<tc>, window_params = [{transform_indices = @transform_0, window_bounds = array<i64: 1, 1, 128>}, {transform_indices = @transform_1, window_bounds = array<i64: 1, 16, 1>}, {transform_indices = @transform_2, window_bounds = array<i64: 1, 16, 128>}, {transform_indices = @transform_3, window_bounds = array<i64: 1, 16, 128>}]} {
    %c0 = arith.constant 0 : index
    %c0_0 = arith.constant 0 : index
    %c0_1 = arith.constant 0 : index
    %0 = vector.load %arg1[%c0, %c0_0, %c0_1] : memref<1x1x128xi32, #tpu.memory_space<vmem>>, vector<1x1x128xi32>
    %c0_i32 = arith.constant 0 : i32
    %1 = vector.broadcast %c0_i32 : i32 to vector<1x1x128xi32>
    %2 = arith.cmpi sgt, %0, %1 : vector<1x1x128xi32>
    %c0_2 = arith.constant 0 : index
    %c0_3 = arith.constant 0 : index
    %c0_4 = arith.constant 0 : index
    %3 = vector.load %arg2[%c0_2, %c0_3, %c0_4] : memref<1x16x1xi32, #tpu.memory_space<vmem>>, vector<1x16x1xi32>
    %c0_i32_5 = arith.constant 0 : i32
    %4 = vector.broadcast %c0_i32_5 : i32 to vector<1x16x1xi32>
    %5 = arith.cmpi sgt, %3, %4 : vector<1x16x1xi32>
    %6 = vector.broadcast %2 : vector<1x1x128xi1> to vector<1x16x128xi1>
    %7 = vector.broadcast %5 : vector<1x16x1xi1> to vector<1x16x128xi1>
    %8 = arith.ori %6, %7 : vector<1x16x128xi1>
    %c0_6 = arith.constant 0 : index
    %c0_7 = arith.constant 0 : index
    %c0_8 = arith.constant 0 : index
    %9 = vector.load %arg3[%c0_6, %c0_7, %c0_8] : memref<1x16x128xf32, #tpu.memory_space<vmem>>, vector<1x16x128xf32>
    %c0_i32_9 = arith.constant 0 : i32
    %10 = arith.sitofp %c0_i32_9 : i32 to f32
    %11 = vector.broadcast %10 : f32 to vector<1x16x128xf32>
    %12 = arith.select %8, %11, %9 : vector<1x16x128xi1>, vector<1x16x128xf32>
    %c0_10 = arith.constant 0 : index
    %c0_11 = arith.constant 0 : index
    %c0_12 = arith.constant 0 : index
    %13 = vector.load %arg4[%c0_10, %c0_11, %c0_12] : memref<1x16x128xf32, #tpu.memory_space<vmem>>, vector<1x16x128xf32>
    tpu.vector_store %arg4[%c0_10, %c0_11, %c0_12], %12 {strides = array<i32>} : memref<1x16x128xf32, #tpu.memory_space<vmem>>, vector<1x16x128xf32>,
    return
  }
  func.func @transform_0(%arg0: i32) -> (i32, i32, i32) {
    %c0_i32 = arith.constant 0 : i32
    %c0_i32_0 = arith.constant 0 : i32
    %c0_i32_1 = arith.constant 0 : i32
    return %arg0, %c0_i32, %c0_i32_0 : i32, i32, i32
  }
  func.func @transform_1(%arg0: i32) -> (i32, i32, i32) {
    %c0_i32 = arith.constant 0 : i32
    %c0_i32_0 = arith.constant 0 : i32
    %c0_i32_1 = arith.constant 0 : i32
    return %arg0, %c0_i32, %c0_i32_0 : i32, i32, i32
  }
  func.func @transform_2(%arg0: i32) -> (i32, i32, i32) {
    %c0_i32 = arith.constant 0 : i32
    %c0_i32_0 = arith.constant 0 : i32
    %c0_i32_1 = arith.constant 0 : i32
    return %arg0, %c0_i32, %c0_i32_0 : i32, i32, i32
  }
  func.func @transform_3(%arg0: i32) -> (i32, i32, i32) {
    %c0_i32 = arith.constant 0 : i32
    %c0_i32_0 = arith.constant 0 : i32
    %c0_i32_1 = arith.constant 0 : i32
    return %arg0, %c0_i32, %c0_i32_0 : i32, i32, i32
  }
}

</mosaic_0001>

<llo_original>
// kernel: tpu_custom_call.1
$region0: #{tpu_custom_call.1}
  #allocation0 [shape = 'u32[]', space=smem, size = 0x4, offset = 0x4, fixed_abs, tag = 'smem constant byte address 0x4 - core index']
  #allocation1 [shape = 'u32[144,128]{1,0:T(1,128)}', space=vmem, size = 0x12000, scoped, tag = 'internal scratch']
  %s0 = inlined_call_operand.vmem [shape: s32[2,1,128], index: 0, kind: input, shape index: {}]
  %s1 = inlined_call_operand.vmem [shape: s32[2,16,1], index: 1, kind: input, shape index: {}]
  %s2 = inlined_call_operand.vmem [shape: f32[2,16,128], index: 2, kind: input, shape index: {}]
  %s3 = inlined_call_operand.hbm [shape: f32[2,16,128], index: 3, kind: output, shape index: {}]
  %s4 = sld [smem:[#allocation0]]
  $region45: #{tpu_custom_call.1} parent=0
    _
  %s6 = ssub.s32 1, %s4
  %s7 = scalar_select 0, %s6, %s4
  $region1: #{tpu_custom_call.1} parent=0
    #allocation2 [shape = 'u8[16384]{0}', space=vmem, size = 0x4000, scoped, tag = 'output window, operand 0']
    #allocation3 [shape = 's32[2]{0}', space=sflag, size = 0x8, scoped, tag = 'scoped memory for tpu_custom_call.1']
    %8 = vsyncpa [#allocation3], 0
    %s9 = scalar_lea.sflag [#allocation3], 1
    %10 = vsyncpa %s9, 0
    loop: start=0, step=1, limit=4
    $region2: #{tpu_custom_call.1} parent=1 // loop_pre_header
      _
    $region3: #{tpu_custom_call.1} parent=1 // loop_header
      %s12 = sphi 0, %s16
      %p13 = scmp.ge.s32.totalorder %s12, 4
      %s22 = sphi 0, %s24
      %s25 = sphi 0, %s22
      %s26 = sphi 0, %s25
      %s42 = sphi 0, %s26
      %s48 = sphi 0, %s50
      %s51 = sphi 0, %s48
      %s52 = sphi 0, %s51
      %s68 = sphi 0, %s52
      %s74 = sphi 0, %s76
      %s77 = sphi 0, %s74
      %s78 = sphi 0, %s77
      %s94 = sphi 0, %s78
      %s100 = sphi 0, %s102
      %s103 = sphi 0, %s100
      %s104 = sphi 0, %s103
      %s120 = sphi 0, %s104
    $region4: #{tpu_custom_call.1} parent=1 // loop_header_branch
      %15 = sbr.rel (%p13) target = $region8
    $region5: #{tpu_custom_call.1} parent=1 // loop_body
      %s17 = ssub.s32 %s12, 1
      %s18 = ssub.s32 %s12, 2
      %s19 = sadd.s32 %s12, 1
      %s20 = ssub.s32 %s12, %s19
      %p21 = scmp.eq.s32.totalorder %s20, 0
      %s23 = sadd.s32 %s22, 1
      %s24 = scalar_select %p21, %s22, %s23
      %p27 = pneg %p21
      %p28 = scmp.eq.s32.totalorder %s12, 1
      %p29 = por %p27, %p28
      %p30 = scmp.ne.s32.totalorder %s22, %s25
      %p31 = scmp.eq.s32.totalorder %s12, 0
      %p32 = por %p30, %p31
      %p33 = scmp.ne.s32.totalorder %s22, %s25
      %p34 = scmp.eq.s32.totalorder %s17, 1
      %p35 = por %p33, %p34
      %p36 = scmp.ne.s32.totalorder %s25, %s26
      %p37 = scmp.eq.s32.totalorder %s17, 0
      %p38 = por %p36, %p37
      %p39 = scmp.ne.s32.totalorder %s25, %s26
      %p40 = scmp.eq.s32.totalorder %s18, 1
      %p41 = por %p39, %p40
      %p43 = scmp.ne.s32.totalorder %s26, %s42
      %p44 = scmp.eq.s32.totalorder %s18, 0
      %p45 = por %p43, %p44
      %s46 = ssub.s32 %s12, %s19
      %p47 = scmp.eq.s32.totalorder %s46, 0
      %s49 = sadd.s32 %s48, 1
      %s50 = scalar_select %p47, %s48, %s49
      %p53 = pneg %p47
      %p54 = scmp.eq.s32.totalorder %s12, 1
      %p55 = por %p53, %p54
      %p56 = scmp.ne.s32.totalorder %s48, %s51
      %p57 = scmp.eq.s32.totalorder %s12, 0
      %p58 = por %p56, %p57
      %p59 = scmp.ne.s32.totalorder %s48, %s51
      %p60 = scmp.eq.s32.totalorder %s17, 1
      %p61 = por %p59, %p60
      %p62 = scmp.ne.s32.totalorder %s51, %s52
      %p63 = scmp.eq.s32.totalorder %s17, 0
      %p64 = por %p62, %p63
      %p65 = scmp.ne.s32.totalorder %s51, %s52
      %p66 = scmp.eq.s32.totalorder %s18, 1
      %p67 = por %p65, %p66
      %p69 = scmp.ne.s32.totalorder %s52, %s68
      %p70 = scmp.eq.s32.totalorder %s18, 0
      %p71 = por %p69, %p70
      %s72 = ssub.s32 %s12, %s19
      %p73 = scmp.eq.s32.totalorder %s72, 0
      %s75 = sadd.s32 %s74, 1
      %s76 = scalar_select %p73, %s74, %s75
      %p79 = pneg %p73
      %p80 = scmp.eq.s32.totalorder %s12, 1
      %p81 = por %p79, %p80
      %p82 = scmp.ne.s32.totalorder %s74, %s77
      %p83 = scmp.eq.s32.totalorder %s12, 0
      %p84 = por %p82, %p83
      %p85 = scmp.ne.s32.totalorder %s74, %s77
      %p86 = scmp.eq.s32.totalorder %s17, 1
      %p87 = por %p85, %p86
      %p88 = scmp.ne.s32.totalorder %s77, %s78
      %p89 = scmp.eq.s32.totalorder %s17, 0
      %p90 = por %p88, %p89
      %p91 = scmp.ne.s32.totalorder %s77, %s78
      %p92 = scmp.eq.s32.totalorder %s18, 1
      %p93 = por %p91, %p92
      %p95 = scmp.ne.s32.totalorder %s78, %s94
      %p96 = scmp.eq.s32.totalorder %s18, 0
      %p97 = por %p95, %p96
      %s98 = ssub.s32 %s12, %s19
      %p99 = scmp.eq.s32.totalorder %s98, 0
      %s101 = sadd.s32 %s100, 1
      %s102 = scalar_select %p99, %s100, %s101
      %p105 = pneg %p99
      %p106 = scmp.eq.s32.totalorder %s12, 1
      %p107 = por %p105, %p106
      %p108 = scmp.ne.s32.totalorder %s100, %s103
      %p109 = scmp.eq.s32.totalorder %s12, 0
      %p110 = por %p108, %p109
      %p111 = scmp.ne.s32.totalorder %s100, %s103
      %p112 = scmp.eq.s32.totalorder %s17, 1
      %p113 = por %p111, %p112
      %p114 = scmp.ne.s32.totalorder %s103, %s104
      %p115 = scmp.eq.s32.totalorder %s17, 0
      %p116 = por %p114, %p115
      %p117 = scmp.ne.s32.totalorder %s103, %s104
      %p118 = scmp.eq.s32.totalorder %s18, 1
      %p119 = por %p117, %p118
      %p121 = scmp.ne.s32.totalorder %s104, %s120
      %p122 = scmp.eq.s32.totalorder %s18, 0
      %p123 = por %p121, %p122
      %p124 = scmp.le.s32.totalorder 1, %s12
      %p125 = scmp.lt.s32.totalorder %s12, 3
      %p126 = pnand %p124, %p125
      %p127 = pneg %p126
      // Predicated region
      $region9: #{tpu_custom_call.1} parent=5 // pred_check
        _
      $region10: #{tpu_custom_call.1} parent=5 // pred_check_branch
        %129 = sbr.rel (%p126) target = $region12
      $region11: #{tpu_custom_call.1} parent=5 // pred_region
        %s130 = ssub.s32 %s12, 1
      $region12: #{tpu_custom_call.1} parent=5 // pred_fallthru
        _
      %p131 = scmp.lt.s32.totalorder %s12, 2
      // Predicated region
      $region13: #{tpu_custom_call.1} parent=5 // pred_check
        %p132 = pneg %p131
      $region14: #{tpu_custom_call.1} parent=5 // pred_check_branch
        %134 = sbr.rel (%p132) target = $region16
      $region15: #{tpu_custom_call.1} parent=5 // pred_region
        // Predicated region
        $region17: #{tpu_custom_call.1} parent=15 // pred_check
          %p135 = pneg %p32
        $region18: #{tpu_custom_call.1} parent=15 // pred_check_branch
          %137 = sbr.rel (%p135) target = $region20
        $region19: #{tpu_custom_call.1} parent=15 // pred_region
          %p138 = scmp.lt.s32.totalorder %s12, 1
          %s139 = scalar_select %p138, %s12, 1
          %s140 = scalar_lea.vmem %s0, %s139
        $region20: #{tpu_custom_call.1} parent=15 // pred_fallthru
          _
        // Predicated region
        $region21: #{tpu_custom_call.1} parent=15 // pred_check
          %p141 = pneg %p58
        $region22: #{tpu_custom_call.1} parent=15 // pred_check_branch
          %143 = sbr.rel (%p141) target = $region24
        $region23: #{tpu_custom_call.1} parent=15 // pred_region
          %p144 = scmp.lt.s32.totalorder %s12, 1
          %s145 = scalar_select %p144, %s12, 1
          %s146 = smul.addr %s145, 2
          %s147 = smul.addr %s146, 8
          %s148 = scalar_lea.vmem %s1, %s147
        $region24: #{tpu_custom_call.1} parent=15 // pred_fallthru
          _
        // Predicated region
        $region25: #{tpu_custom_call.1} parent=15 // pred_check
          %p149 = pneg %p84
        $region26: #{tpu_custom_call.1} parent=15 // pred_check_branch
          %151 = sbr.rel (%p149) target = $region28
        $region27: #{tpu_custom_call.1} parent=15 // pred_region
          %p152 = scmp.lt.s32.totalorder %s12, 1
          %s153 = scalar_select %p152, %s12, 1
          %s154 = smul.addr %s153, 2
          %s155 = smul.addr %s154, 8
          %s156 = scalar_lea.vmem %s2, %s155
        $region28: #{tpu_custom_call.1} parent=15 // pred_fallthru
          _
      $region16: #{tpu_custom_call.1} parent=5 // pred_fallthru
        _
      %p157 = scmp.le.s32.totalorder 1, %s12
      %p158 = scmp.lt.s32.totalorder %s12, 3
      %p159 = pnand %p157, %p158
      %p160 = pneg %p159
      // Predicated region
      $region29: #{tpu_custom_call.1} parent=5 // pred_check
        _
      $region30: #{tpu_custom_call.1} parent=5 // pred_check_branch
        %162 = sbr.rel (%p159) target = $region32
      $region31: #{tpu_custom_call.1} parent=5 // pred_region
        %s163 = ssub.s32 %s12, 1
        %p164 = scmp.lt.s32.totalorder %s17, 1
        %s165 = scalar_select %p164, %s17, 1
        %s166 = scalar_lea.vmem %s0, %s165
        %p167 = pneg %p38
        %p168 = pneg %p35
        %p169 = scmp.lt.s32.totalorder %s17, 1
        %s170 = scalar_select %p169, %s17, 1
        %s171 = smul.addr %s170, 2
        %s172 = smul.addr %s171, 8
        %s173 = scalar_lea.vmem %s1, %s172
        %p174 = pneg %p64
        %p175 = pneg %p61
        %p176 = scmp.lt.s32.totalorder %s17, 1
        %s177 = scalar_select %p176, %s17, 1
        %s178 = smul.addr %s177, 2
        %s179 = smul.addr %s178, 8
        %s180 = scalar_lea.vmem %s2, %s179
        %p181 = pneg %p90
        %p182 = pneg %p87
        %p183 = pneg %p116
        %p184 = pneg %p113
        %s185 = sand.u32 %s103, 1
        %s186 = scalar_lea.sflag [#allocation3], %s185
        %s187 = sand.u32 %s103, 1
        %s188 = smul.addr %s187, 16
        %s189 = scalar_lea.vmem [#allocation2], %s188
        %p190 = scmp.lt.s32.totalorder %s17, 1
        %s191 = scalar_select %p190, %s17, 1
        %s192 = scalar_lea.vmem %s0, %s191
        %p193 = scmp.lt.s32.totalorder %s17, 1
        %s194 = scalar_select %p193, %s17, 1
        %s195 = smul.addr %s194, 2
        %s196 = smul.addr %s195, 8
        %s197 = scalar_lea.vmem %s1, %s196
        %p198 = scmp.lt.s32.totalorder %s17, 1
        %s199 = scalar_select %p198, %s17, 1
        %s200 = smul.addr %s199, 2
        %s201 = smul.addr %s200, 8
        %s202 = scalar_lea.vmem %s2, %s201
        %v203 = vld [vmem:[%s192] sm:$0x1]
        %vm204 = vcmp.gt.s32.totalorder %v203, 0
        %v205 = vld [vmem:[%s197] sm:$0xff]
        %v206 = vld [vmem:[%s197 + $0x8] sm:$0xff]
        %vm207 = vcmp.gt.s32.totalorder %v205, 0
        %vm208 = vcmp.gt.s32.totalorder %v206, 0
        %v209 = vsel %vm204, 1, 0
        %v210 = vlaneseq
        %v211 = vshrl.u32 %v210, 7
        %v212 = vsub.s32 0, %v211
        %v213 = vrot.slane %v209, %v212
        %vm214 = vcmp.eq.s32.totalorder %v213, 1
        %v215 = vsel %vm207, 1, 0
        %v216 = vsel %vm208, 1, 0
        %217 = vset.pattern.permute.xlu0 0
        %218 = vperm.xlu0 %217, %v215
        %v219 = vpop.permute.xlu0 %218
        %220 = vset.pattern.permute.xlu0 0
        %221 = vperm.xlu0 %220, %v216
        %v222 = vpop.permute.xlu0 %221
        %vm223 = vcmp.eq.s32.totalorder %v219, 1
        %vm224 = vcmp.eq.s32.totalorder %v222, 1
        %vm225 = vmor %vm214, %vm223
        %vm226 = vmor %vm214, %vm224
        %v227 = vld [vmem:[%s202] sm:$0xff]
        %v228 = vld [vmem:[%s202 + $0x8] sm:$0xff]
        %v229 = vsel %vm225, 0.0, %v227
        %v230 = vsel %vm226, 0.0, %v228
        %231 = vst [vmem:[%s189] sm:$0xff] %v229
        %232 = vst [vmem:[%s189 + $0x8] sm:$0xff] %v230
        %s233 = sand.u32 %s103, 1
        %s234 = scalar_lea.sflag [#allocation3], %s233
        %s235 = sand.u32 %s103, 1
        %s236 = smul.addr %s235, 16
        %s237 = scalar_lea.vmem [#allocation2], %s236
        // Predicated region
        $region33: #{tpu_custom_call.1} parent=31 // pred_check
          %p238 = pneg %p113
        $region34: #{tpu_custom_call.1} parent=31 // pred_check_branch
          %240 = sbr.rel (%p238) target = $region36
        $region35: #{tpu_custom_call.1} parent=31 // pred_region
          %s242 = ssub.s32 256, 256
          %243 = vsyncadd %s234, %s242
          %s244 = smul.addr %s17, 2
          %s245 = smul.addr %s244, 128
          %s246 = scalar_lea.hbm %s3, %s245
          %s247 = sshll.u32 %s237, 4
          %s248 = int_to_ptr.vmem [resolvable:$true] %s247
          %253 = dma.vmem_to_hbm [thread:$0]  %s248, 256, %s246, %s234, 128, 128, 8
        $region36: #{tpu_custom_call.1} parent=31 // pred_fallthru
          _
      $region32: #{tpu_custom_call.1} parent=5 // pred_fallthru
        _
      %p254 = scmp.le.s32.totalorder 2, %s12
      // Predicated region
      $region37: #{tpu_custom_call.1} parent=5 // pred_check
        %p255 = pneg %p254
      $region38: #{tpu_custom_call.1} parent=5 // pred_check_branch
        %257 = sbr.rel (%p255) target = $region40
      $region39: #{tpu_custom_call.1} parent=5 // pred_region
        %s258 = ssub.s32 %s12, 2
        // Predicated region
        $region41: #{tpu_custom_call.1} parent=39 // pred_check
          %p259 = pneg %p119
        $region42: #{tpu_custom_call.1} parent=39 // pred_check_branch
          %261 = sbr.rel (%p259) target = $region44
        $region43: #{tpu_custom_call.1} parent=39 // pred_region
          %s262 = sand.u32 %s104, 1
          %s263 = scalar_lea.sflag [#allocation3], %s262
          %s264 = sand.u32 %s104, 1
          %s265 = smul.addr %s264, 16
          %s266 = scalar_lea.vmem [#allocation2], %s265
          %267 = dma.done %s263, 256
        $region44: #{tpu_custom_call.1} parent=39 // pred_fallthru
          _
      $region40: #{tpu_custom_call.1} parent=5 // pred_fallthru
        _
    $region6: #{tpu_custom_call.1} parent=1 // loop_footer
      %s16 = sadd.s32 1, %s12
    $region7: #{tpu_custom_call.1} parent=1 // loop_footer_branch
      %11 = sbr.rel target = $region3
    $region8: #{tpu_custom_call.1} parent=1 // loop_exit
      _
    %268 = vsyncpa [#allocation3], 1
    %s269 = scalar_lea.sflag [#allocation3], 1
    %270 = vsyncpa %s269, 1

</llo_original>
